<compile_context>
chip_gen: v7x
topology: tpu7x:2x2x1
jax: 0.10.0
libtpu: 0.0.40
codegen_flags: <defaults>
</compile_context>

<pallas_src>
import functools

import jax
import jax.numpy as jnp
from jax import lax
from jax.experimental import pallas as pl
from jax.experimental.pallas import tpu as pltpu


def _round_up(v, m):
    return -(-v // m) * m


def _int_pow(v, p):
    """Literal v**p for integer p >= 1 via repeated multiplies (VALU, not EUP)."""
    acc = None
    base = v
    while p > 0:
        if p & 1:
            acc = base if acc is None else acc * base
        p >>= 1
        if p > 0:
            base = base * base
    return acc


def normalize_kernel(x_ref, out_ref, *, power):
    # Whole (tb, D) tile resident in VMEM; reduction is along lanes (last dim).
    xf = x_ref[...].astype(jnp.float32)

    if power == 2:
        # Fast path: sum of squares + rsqrt (EUP), avoids pow/divide on the VPU.
        ssq = jnp.sum(xf * xf, axis=-1, keepdims=True)
        inv_norm = lax.rsqrt(ssq)
    else:
        p = float(power)
        if p.is_integer() and p >= 1:
            xp = _int_pow(xf, int(p))        # VALU multiplies, not EUP pow
        else:
            xp = jnp.power(xf, p)            # fallback for non-integer powers
        s = jnp.sum(xp, axis=-1, keepdims=True)
        inv_norm = jnp.power(s, -1.0 / p)    # only tb elements -> cheap on EUP

    # Re-read x for the rescale so the full-tile f32 temp does not have to stay
    # live across both the reduction and the store (matters for bf16/int8 inputs).
    out_ref[...] = (x_ref[...].astype(jnp.float32) * inv_norm).astype(out_ref.dtype)


def _pick_row_tile(batch, d, itemsize):
    """VMEM-, D- and dtype-aware row tile."""
    # Sublane packing: f32 -> 8 rows, bf16/f16 -> 16, int8/fp8 -> 32.
    pack = max(8, 32 // itemsize)
    bytes_per_row = max(1, d * itemsize)
    # ~24 MiB total across the 4 auto-pipelined buffers (2 in + 2 out): safe on
    # v5e/v6e (128 MiB VMEM) and on v7x (64 MiB physical, 32 MiB scoped default).
    vmem_budget = 24 * 1024 * 1024
    tb = vmem_budget // (4 * bytes_per_row)
    tb = min(tb, 1024)
    # Keep >= ~4 grid steps when the batch allows it, so the BlockSpec pipeline
    # overlaps DMA/compute and both TensorCores (v7x) get work.
    if batch >= 4 * pack:
        tb = min(tb, _round_up(-(-batch // 4), pack))
    # Round down to the sublane pack, never below one pack.
    tb = max(pack, (tb // pack) * pack)
    # No point in a tile larger than the (pack-padded) batch.
    tb = min(tb, _round_up(batch, pack))
    return tb


def normalize_forward(x, power=2):
    """x: (B, D). Returns x normalized by (sum_j x_j^power)^(1/power) along dim=1."""
    B, D = x.shape
    itemsize = jnp.dtype(x.dtype).itemsize

    # Lane-dense feature dim: pad to a multiple of 128. Zero padding does not
    # change the power sum (0**p == 0 for p > 0).
    D_pad = _round_up(D, 128)
    x_in = x if D_pad == D else jnp.pad(x, ((0, 0), (0, D_pad - D)))

    tb = _pick_row_tile(B, D_pad, itemsize)
    grid = (pl.cdiv(B, tb),)  # partial last block handled by the pipeline

    kernel = functools.partial(normalize_kernel, power=power)

    out = pl.pallas_call(
        kernel,
        out_shape=jax.ShapeDtypeStruct((B, D_pad), x.dtype),
        grid=grid,
        in_specs=[pl.BlockSpec((tb, D_pad), lambda i: (i, 0))],
        out_specs=pl.BlockSpec((tb, D_pad), lambda i: (i, 0)),
        compiler_params=pltpu.CompilerParams(
            dimension_semantics=("parallel",),   # rows independent -> megacore-shardable
            vmem_limit_bytes=48 * 1024 * 1024,   # above v5e/v6e scoped defaults, < v7x 64 MiB
        ),
        cost_estimate=pl.CostEstimate(
            flops=3 * B * D_pad,
            transcendentals=B,
            bytes_accessed=2 * B * D_pad * itemsize,
        ),
    )(x_in)

    return out if D_pad == D else out[:, :D]


def reference_normalize(x, power=2):
    norm = jnp.power(jnp.sum(jnp.power(x, power), axis=1, keepdims=True), 1.0 / power)
    return x / norm


if __name__ == "__main__":
    key = jax.random.PRNGKey(0)

    # 1) Lane-dense case, p=2 fast path.
    x = jax.random.normal(key, (8, 256), dtype=jnp.float32)
    out = jax.block_until_ready(normalize_forward(x, power=2))
    ref = reference_normalize(x, power=2)
    assert out.shape == x.shape
    assert jnp.allclose(out, ref, atol=1e-5, rtol=1e-5)

    # 2) Non-multiple-of-128 features + batch not a multiple of 8 (pad/partial path).
    x2 = jax.random.normal(jax.random.fold_in(key, 1), (6, 96), dtype=jnp.float32)
    out2 = jax.block_until_ready(normalize_forward(x2, power=2))
    ref2 = reference_normalize(x2, power=2)
    assert out2.shape == x2.shape
    assert jnp.allclose(out2, ref2, atol=1e-5, rtol=1e-5)

    # 3) General integer power path (positive inputs so the p-th root is well-defined,
    #    same as the PyTorch module would require).
    x3 = jnp.abs(jax.random.normal(jax.random.fold_in(key, 2), (8, 256), dtype=jnp.float32)) + 0.1
    out3 = jax.block_until_ready(normalize_forward(x3, power=3))
    ref3 = reference_normalize(x3, power=3)
    assert jnp.allclose(out3, ref3, atol=1e-5, rtol=1e-5)

    # 4) bf16 input (exercises the upcast/re-read path and 16-row sublane pack).
    x4 = jax.random.normal(jax.random.fold_in(key, 3), (16, 256), dtype=jnp.bfloat16)
    out4 = jax.block_until_ready(normalize_forward(x4, power=2))
    ref4 = reference_normalize(x4.astype(jnp.float32), power=2).astype(jnp.bfloat16)
    assert jnp.allclose(out4.astype(jnp.float32), ref4.astype(jnp.float32), atol=2e-2, rtol=2e-2)

    print("KERNEL_OK")
</pallas_src>

<mosaic_0001>
module attributes {stable_mosaic.version = 11 : i64} {
  func.func @normalize_kernel(%arg0: i32, %arg1: memref<8x256xf32, #tpu.memory_space<vmem>>, %arg2: memref<8x256xf32, #tpu.memory_space<vmem>>) attributes {dimension_semantics = [#tpu.dimension_semantics<parallel>], iteration_bounds = array<i64: 1>, scalar_prefetch = 0 : i64, scratch_operands = 0 : i64, tpu.core_type = #tpu.core_type<tc>, window_params = [{transform_indices = @transform_0, window_bounds = array<i64: 8, 256>}, {transform_indices = @transform_1, window_bounds = array<i64: 8, 256>}]} {
    %c0 = arith.constant 0 : index
    %c0_0 = arith.constant 0 : index
    %0 = vector.load %arg1[%c0, %c0_0] : memref<8x256xf32, #tpu.memory_space<vmem>>, vector<8x256xf32>
    %1 = arith.mulf %0, %0 : vector<8x256xf32>
    %cst = arith.constant dense<0.000000e+00> : vector<8xf32>
    %2 = vector.multi_reduction <add>, %1, %cst [1] : vector<8x256xf32> to vector<8xf32>
    %3 = vector.shape_cast %2 : vector<8xf32> to vector<8x1xf32>
    %4 = math.rsqrt %3 : vector<8x1xf32>
    %c0_1 = arith.constant 0 : index
    %c0_2 = arith.constant 0 : index
    %5 = vector.load %arg1[%c0_1, %c0_2] : memref<8x256xf32, #tpu.memory_space<vmem>>, vector<8x256xf32>
    %6 = vector.broadcast %4 : vector<8x1xf32> to vector<8x256xf32>
    %7 = arith.mulf %5, %6 : vector<8x256xf32>
    %c0_3 = arith.constant 0 : index
    %c0_4 = arith.constant 0 : index
    %8 = vector.load %arg2[%c0_3, %c0_4] : memref<8x256xf32, #tpu.memory_space<vmem>>, vector<8x256xf32>
    tpu.vector_store %arg2[%c0_3, %c0_4], %7 {strides = array<i32>} : memref<8x256xf32, #tpu.memory_space<vmem>>, vector<8x256xf32>,
    return
  }
  func.func @transform_0(%arg0: i32) -> (i32, i32) {
    %c0_i32 = arith.constant 0 : i32
    %c0_i32_0 = arith.constant 0 : i32
    return %arg0, %c0_i32 : i32, i32
  }
  func.func @transform_1(%arg0: i32) -> (i32, i32) {
    %c0_i32 = arith.constant 0 : i32
    %c0_i32_0 = arith.constant 0 : i32
    return %arg0, %c0_i32 : i32, i32
  }
}

</mosaic_0001>

<llo_original>
// kernel: tpu_custom_call.1
$region0: #{tpu_custom_call.1}
  #allocation0 [shape = 'u32[]', space=smem, size = 0x4, offset = 0x4, fixed_abs, tag = 'smem constant byte address 0x4 - core index']
  #allocation1 [shape = 'u32[144,128]{1,0:T(1,128)}', space=vmem, size = 0x12000, scoped, tag = 'internal scratch']
  %s0 = inlined_call_operand.hbm [shape: f32[8,256], index: 0, kind: input, shape index: {}]
  %s1 = inlined_call_operand.hbm [shape: f32[8,256], index: 1, kind: output, shape index: {}]
  %s2 = sld [smem:[#allocation0]]
  $region18: #{tpu_custom_call.1} parent=0
    _
  %s4 = ssub.s32 1, %s2
  %s5 = scalar_select 0, %s4, %s2
  $region1: #{tpu_custom_call.1} parent=0
    #allocation2 [shape = 'u8[8192]{0}', space=vmem, size = 0x2000, scoped, tag = 'input window, operand 0, single buffered']
    #allocation3 [shape = 's32[1]{0}', space=sflag, size = 0x4, scoped, tag = 'scoped memory for tpu_custom_call.1']
    #allocation4 [shape = 's32[1]{0}', space=sflag, size = 0x4, scoped, tag = 'scoped memory for tpu_custom_call.1']
    #allocation5 [shape = 'u8[8192]{0}', space=vmem, size = 0x2000, scoped, tag = 'output window, operand 0, single buffered']
    %6 = vsyncpa [#allocation3], 0
    %7 = vsyncpa [#allocation4], 0
    // Predicated region
    $region2: #{tpu_custom_call.1} parent=1 // pred_check
      _
    $region3: #{tpu_custom_call.1} parent=1 // pred_check_branch
      %9 = sbr.rel (0) target = $region5
    $region4: #{tpu_custom_call.1} parent=1 // pred_region
      %s11 = ssub.s32 256, 256
      %12 = vsyncadd [#allocation3], %s11
      %s14 = sshll.u32 [#allocation2], 4
      %s15 = int_to_ptr.vmem [resolvable:$true] %s14
      %17 = dma.hbm_to_vmem [thread:$0]  %s0, 256, %s15, [#allocation3]
    $region5: #{tpu_custom_call.1} parent=1 // pred_fallthru
      _
    // Predicated region
    $region6: #{tpu_custom_call.1} parent=1 // pred_check
      _
    $region7: #{tpu_custom_call.1} parent=1 // pred_check_branch
      %19 = sbr.rel (0) target = $region9
    $region8: #{tpu_custom_call.1} parent=1 // pred_region
      %20 = dma.done [#allocation3], 256
    $region9: #{tpu_custom_call.1} parent=1 // pred_fallthru
      _
    %v21 = vld [vmem:[#allocation2] sm:$0xff]
    %v22 = vld [vmem:[#allocation2 + $0x8] sm:$0xff]
    %v23 = vmul.f32 %v21, %v21
    %v24 = vmul.f32 %v22, %v22
    %v25 = vadd.f32 %v23, %v24
    %26 = vadd.xlane.f32.xlu0 %v25
    %v27 = vpop.xlane.xlu0 %26
    %v28 = vrsqrt.pop %v27
    %v29 = vmul.f32 %v21, %v28
    %v30 = vmul.f32 %v22, %v28
    %31 = vst [vmem:[#allocation5] sm:$0xff] %v29
    %32 = vst [vmem:[#allocation5 + $0x8] sm:$0xff] %v30
    // Predicated region
    $region10: #{tpu_custom_call.1} parent=1 // pred_check
      _
    $region11: #{tpu_custom_call.1} parent=1 // pred_check_branch
      %34 = sbr.rel (0) target = $region13
    $region12: #{tpu_custom_call.1} parent=1 // pred_region
      %s36 = ssub.s32 256, 256
      %37 = vsyncadd [#allocation4], %s36
      %s39 = sshll.u32 [#allocation5], 4
      %s40 = int_to_ptr.vmem [resolvable:$true] %s39
      %42 = dma.vmem_to_hbm [thread:$0]  %s40, 256, %s1, [#allocation4]
    $region13: #{tpu_custom_call.1} parent=1 // pred_fallthru
      _
    // Predicated region
    $region14: #{tpu_custom_call.1} parent=1 // pred_check
      _
    $region15: #{tpu_custom_call.1} parent=1 // pred_check_branch
      %44 = sbr.rel (0) target = $region17
    $region16: #{tpu_custom_call.1} parent=1 // pred_region
      %45 = dma.done [#allocation4], 256
    $region17: #{tpu_custom_call.1} parent=1 // pred_fallthru
      _
    %46 = vsyncpa [#allocation3], 1
    %47 = vsyncpa [#allocation4], 1

</llo_original>
